<compile_context>
chip_gen: v6e
topology: v6e:2x2x1
jax: 0.10.0
libtpu: 0.0.40
codegen_flags: <defaults>
</compile_context>

<pallas_src>
import jax
import jax.numpy as jnp
from jax.experimental import pallas as pl
from jax.experimental.pallas import tpu as pltpu

HIDDEN = 1280       # ESM-2 t33 650M hidden size (fixed by the module)
NUM_LABELS = 2      # module default


def _round_up(n, m):
    return ((n + m - 1) // m) * m


def classifier_kernel(x_ref, wt_ref, b_ref, o_ref):
    """Linear classifier head on one tile of tokens.

    x_ref : (TILE, H)   bf16 representations tile
    wt_ref: (NL, H)     bf16 classifier weight, transposed (lane-dense)
    b_ref : (1, NL)     f32 classifier bias
    o_ref : (TILE, NL)  f32 output logits tile
    """
    logits = jax.lax.dot_general(
        x_ref[...], wt_ref[...],
        dimension_numbers=(((1,), (1,)), ((), ())),   # contract H with H
        preferred_element_type=jnp.float32)
    o_ref[...] = logits + b_ref[...]


def esm1v_token_classifier(reps, w, b, *, tile_tokens=1024):
    """reps: [B, L, H]; w: [H, NL]; b: [NL] -> logits [B, L-2, NL] (f32)."""
    B, L, H = reps.shape
    NL = w.shape[1]
    N = B * L

    # bf16 activations / weight (halves HBM read traffic); f32 MXU accumulate.
    x = reps.astype(jnp.bfloat16).reshape(N, H)
    wt = w.T.astype(jnp.bfloat16)                 # (NL, H), lane-dense block
    b2d = b.astype(jnp.float32).reshape(1, NL)

    # Token tile: multiple of 8 sublanes; pad the token axis to a tile multiple.
    tile = min(tile_tokens, _round_up(N, 8))
    n_pad = _round_up(N, tile)
    if n_pad != N:
        x = jnp.pad(x, ((0, n_pad - N), (0, 0)))

    logits_flat = pl.pallas_call(
        classifier_kernel,
        out_shape=jax.ShapeDtypeStruct((n_pad, NL), jnp.float32),
        grid=(n_pad // tile,),
        in_specs=[
            pl.BlockSpec((tile, H), lambda i: (i, 0)),   # token tile
            pl.BlockSpec((NL, H), lambda i: (0, 0)),     # weight (resident)
            pl.BlockSpec((1, NL), lambda i: (0, 0)),     # bias   (resident)
        ],
        out_specs=pl.BlockSpec((tile, NL), lambda i: (i, 0)),
        compiler_params=pltpu.CompilerParams(
            dimension_semantics=("parallel",),
            vmem_limit_bytes=32 * 1024 * 1024),
    )(x, wt, b2d)

    # Drop padding, restore [B, L, NL], then drop BOS/EOS (tiny output slice).
    return logits_flat[:N].reshape(B, L, NL)[:, 1:-1, :]


if __name__ == "__main__":
    key = jax.random.PRNGKey(0)
    k_tok, k_emb, k_w, k_b = jax.random.split(key, 4)

    B, L = 2, 8                      # small batch / sequence (incl. BOS + EOS)
    VOCAB = 33                       # ESM alphabet size

    # Synthetic token ids (what the real module's forward receives).
    token_ids = jax.random.randint(k_tok, (B, L), 0, VOCAB, dtype=jnp.int32)

    # Deterministic stand-in for the pretrained ESM-2 backbone representations.
    # TODO(synk): replace with real 33-layer transformer representations.
    emb_table = jax.random.normal(k_emb, (VOCAB, HIDDEN), dtype=jnp.float32) * 0.02
    reps = emb_table[token_ids]      # [B, L, HIDDEN]

    # Deterministic classifier parameters (nn.Linear(1280, num_labels)).
    w = jax.random.normal(k_w, (HIDDEN, NUM_LABELS), dtype=jnp.float32) * 0.02
    b = jax.random.normal(k_b, (NUM_LABELS,), dtype=jnp.float32) * 0.02

    logits = esm1v_token_classifier(reps, w, b)
    jax.block_until_ready(logits)

    assert logits.shape == (B, L - 2, NUM_LABELS)

    # Tight check against a reference at matching precision (bf16 inputs,
    # f32 accumulation), verifying the kernel's compute path exactly.
    reps_bf = reps.astype(jnp.bfloat16).astype(jnp.float32)
    w_bf = w.astype(jnp.bfloat16).astype(jnp.float32)
    ref_bf = jnp.einsum("bld,dn->bln", reps_bf[:, 1:-1, :], w_bf) + b
    assert jnp.allclose(logits, ref_bf, atol=2e-4, rtol=2e-4)

    # Loose check against the full-f32 module semantics (bf16 quantization).
    ref = jnp.einsum("bld,dn->bln", reps[:, 1:-1, :], w) + b
    assert jnp.allclose(logits, ref, atol=2e-2, rtol=2e-2)

    print("KERNEL_OK")
</pallas_src>

<mosaic_0001>
module attributes {stable_mosaic.version = 11 : i64} {
  func.func @classifier_kernel(%arg0: i32, %arg1: memref<16x1280xbf16, #tpu.memory_space<vmem>>, %arg2: memref<2x1280xbf16, #tpu.memory_space<vmem>>, %arg3: memref<1x2xf32, #tpu.memory_space<vmem>>, %arg4: memref<16x2xf32, #tpu.memory_space<vmem>>) attributes {dimension_semantics = [#tpu.dimension_semantics<parallel>], iteration_bounds = array<i64: 1>, scalar_prefetch = 0 : i64, scratch_operands = 0 : i64, tpu.core_type = #tpu.core_type<tc>, window_params = [{transform_indices = @transform_0, window_bounds = array<i64: 16, 1280>}, {pipeline_mode = #tpu.pipeline_mode<synchronous>, transform_indices = @transform_1, window_bounds = array<i64: 2, 1280>}, {pipeline_mode = #tpu.pipeline_mode<synchronous>, transform_indices = @transform_2, window_bounds = array<i64: 1, 2>}, {transform_indices = @transform_3, window_bounds = array<i64: 16, 2>}]} {
    %c0 = arith.constant 0 : index
    %c0_0 = arith.constant 0 : index
    %0 = vector.load %arg1[%c0, %c0_0] : memref<16x1280xbf16, #tpu.memory_space<vmem>>, vector<16x1280xbf16>
    %c0_1 = arith.constant 0 : index
    %c0_2 = arith.constant 0 : index
    %1 = vector.load %arg2[%c0_1, %c0_2] : memref<2x1280xbf16, #tpu.memory_space<vmem>>, vector<2x1280xbf16>
    %cst = arith.constant dense<0.000000e+00> : vector<16x2xf32>
    %2 = tpu.matmul %0, %1, %cst {dimension_numbers = #tpu.dot_dimension_numbers<[1], [1], [0], [0], [0, 0, 1, 0], [], []>} : vector<16x1280xbf16>, vector<2x1280xbf16>, vector<16x2xf32> -> vector<16x2xf32>
    %c0_3 = arith.constant 0 : index
    %c0_4 = arith.constant 0 : index
    %3 = vector.load %arg3[%c0_3, %c0_4] : memref<1x2xf32, #tpu.memory_space<vmem>>, vector<1x2xf32>
    %4 = vector.broadcast %3 : vector<1x2xf32> to vector<16x2xf32>
    %5 = arith.addf %2, %4 : vector<16x2xf32>
    %c0_5 = arith.constant 0 : index
    %c0_6 = arith.constant 0 : index
    %6 = vector.load %arg4[%c0_5, %c0_6] : memref<16x2xf32, #tpu.memory_space<vmem>>, vector<16x2xf32>
    tpu.vector_store %arg4[%c0_5, %c0_6], %5 {strides = array<i32>} : memref<16x2xf32, #tpu.memory_space<vmem>>, vector<16x2xf32>,
    return
  }
  func.func @transform_0(%arg0: i32) -> (i32, i32) {
    %c0_i32 = arith.constant 0 : i32
    %c0_i32_0 = arith.constant 0 : i32
    return %arg0, %c0_i32 : i32, i32
  }
  func.func @transform_1(%arg0: i32) -> (i32, i32) {
    %c0_i32 = arith.constant 0 : i32
    %c0_i32_0 = arith.constant 0 : i32
    %c0_i32_1 = arith.constant 0 : i32
    return %c0_i32, %c0_i32_0 : i32, i32
  }
  func.func @transform_2(%arg0: i32) -> (i32, i32) {
    %c0_i32 = arith.constant 0 : i32
    %c0_i32_0 = arith.constant 0 : i32
    %c0_i32_1 = arith.constant 0 : i32
    return %c0_i32, %c0_i32_0 : i32, i32
  }
  func.func @transform_3(%arg0: i32) -> (i32, i32) {
    %c0_i32 = arith.constant 0 : i32
    %c0_i32_0 = arith.constant 0 : i32
    return %arg0, %c0_i32 : i32, i32
  }
}

</mosaic_0001>

<llo_original>
// kernel: tpu_custom_call.1
$region0: #{tpu_custom_call.1}
  #allocation0 [shape = 'u32[]', space=smem, size = 0x4, offset = 0x4, fixed_abs, tag = 'smem constant byte address 0x4 - core index']
  #allocation1 [shape = 'u32[144,128]{1,0:T(1,128)}', space=vmem, size = 0x12000, scoped, tag = 'internal scratch']
  %s0 = inlined_call_operand.hbm [shape: bf16[16,1280], index: 0, kind: input, shape index: {}]
  %s1 = inlined_call_operand.hbm [shape: bf16[2,1280], index: 1, kind: input, shape index: {}]
  %s2 = inlined_call_operand.vmem [shape: f32[1,2], index: 2, kind: input, shape index: {}]
  %s3 = inlined_call_operand.vmem [shape: f32[16,2], index: 3, kind: output, shape index: {}]
  %s4 = sld [smem:[#allocation0]]
  $region30: #{tpu_custom_call.1} parent=0
    _
  %s6 = ssub.s32 1, %s4
  %s7 = scalar_select 0, %s6, %s4
  $region1: #{tpu_custom_call.1} parent=0
    #allocation2 [shape = 'u8[40960]{0}', space=vmem, size = 0xa000, scoped, tag = 'input window, operand 0, single buffered']
    #allocation3 [shape = 's32[1]{0}', space=sflag, size = 0x4, scoped, tag = 'scoped memory for tpu_custom_call.1']
    #allocation4 [shape = 'u8[5120]{0}', space=vmem, size = 0x1400, scoped, tag = 'input window, operand 1, single buffered']
    #allocation5 [shape = 's32[1]{0}', space=sflag, size = 0x4, scoped, tag = 'scoped memory for tpu_custom_call.1']
    %8 = vsyncpa [#allocation3], 0
    %9 = vsyncpa [#allocation5], 0
    // Predicated region
    $region2: #{tpu_custom_call.1} parent=1 // pred_check
      _
    $region3: #{tpu_custom_call.1} parent=1 // pred_check_branch
      %11 = sbr.rel (0) target = $region5
    $region4: #{tpu_custom_call.1} parent=1 // pred_region
      %s13 = ssub.s32 1280, 1280
      %14 = vsyncadd [#allocation3], %s13
      %s15 = sshll.u32 [#allocation2], 4
      %s16 = int_to_ptr.vmem [resolvable:$true] %s15
      %21 = dma.hbm_to_vmem [thread:$0]  %s0, 1280, %s16, [#allocation3], 640, 640, 40
    $region5: #{tpu_custom_call.1} parent=1 // pred_fallthru
      _
    // Predicated region
    $region6: #{tpu_custom_call.1} parent=1 // pred_check
      _
    $region7: #{tpu_custom_call.1} parent=1 // pred_check_branch
      %23 = sbr.rel (0) target = $region9
    $region8: #{tpu_custom_call.1} parent=1 // pred_region
      %s25 = ssub.s32 160, 160
      %26 = vsyncadd [#allocation5], %s25
      %s28 = sshll.u32 [#allocation4], 4
      %s29 = int_to_ptr.vmem [resolvable:$true] %s28
      %31 = dma.hbm_to_vmem [thread:$0]  %s1, 160, %s29, [#allocation5]
    $region9: #{tpu_custom_call.1} parent=1 // pred_fallthru
      _
    // Predicated region
    $region10: #{tpu_custom_call.1} parent=1 // pred_check
      _
    $region11: #{tpu_custom_call.1} parent=1 // pred_check_branch
      %33 = sbr.rel (0) target = $region13
    $region12: #{tpu_custom_call.1} parent=1 // pred_region
      _
    $region13: #{tpu_custom_call.1} parent=1 // pred_fallthru
      _
    // Predicated region
    $region14: #{tpu_custom_call.1} parent=1 // pred_check
      _
    $region15: #{tpu_custom_call.1} parent=1 // pred_check_branch
      %35 = sbr.rel (0) target = $region17
    $region16: #{tpu_custom_call.1} parent=1 // pred_region
      %36 = dma.done [#allocation3], 1280
    $region17: #{tpu_custom_call.1} parent=1 // pred_fallthru
      _
    // Predicated region
    $region18: #{tpu_custom_call.1} parent=1 // pred_check
      _
    $region19: #{tpu_custom_call.1} parent=1 // pred_check_branch
      %38 = sbr.rel (0) target = $region21
    $region20: #{tpu_custom_call.1} parent=1 // pred_region
      %39 = dma.done [#allocation5], 160
    $region21: #{tpu_custom_call.1} parent=1 // pred_fallthru
      _
    %v41 = vld [vmem:[#allocation2] sm:$0xff]
    %v42 = vld [vmem:[#allocation2 + $0x8] sm:$0xff]
    %v43 = vld [vmem:[#allocation2 + $0x10] sm:$0xff]
    %v44 = vld [vmem:[#allocation2 + $0x18] sm:$0xff]
    %v45 = vld [vmem:[#allocation2 + $0x20] sm:$0xff]
    %v46 = vld [vmem:[#allocation2 + $0x28] sm:$0xff]
    %v47 = vld [vmem:[#allocation2 + $0x30] sm:$0xff]
    %v48 = vld [vmem:[#allocation2 + $0x38] sm:$0xff]
    %v49 = vld [vmem:[#allocation2 + $0x40] sm:$0xff]
    %v50 = vld [vmem:[#allocation2 + $0x48] sm:$0xff]
    %v51 = vld [vmem:[#allocation4] sm:$0xff]
    %v52 = vld [vmem:[#allocation4 + $0x8] sm:$0x3]
    %v53 = vld [vmem:[%s2] sm:$0x1]
    %v55 = vlaneseq
    %v56 = vshrl.u32 %v55, 7
    %v57 = vsub.s32 0, %v56
    %v58 = vrot.slane %v53, %v57
    %v70 = vunpack.c.l.b16 %v41
    %v71 = vunpack.c.h.b16 %v41
    %v72 = vunpack.c.l.b16 %v42
    %v73 = vunpack.c.h.b16 %v42
    %v74 = vunpack.c.l.b16 %v43
    %v75 = vunpack.c.h.b16 %v43
    %v76 = vunpack.c.l.b16 %v44
    %v77 = vunpack.c.h.b16 %v44
    %v78 = vunpack.c.l.b16 %v45
    %v79 = vunpack.c.h.b16 %v45
    %v80 = vunpack.c.l.b16 %v46
    %v81 = vunpack.c.h.b16 %v46
    %v82 = vunpack.c.l.b16 %v47
    %v83 = vunpack.c.h.b16 %v47
    %v84 = vunpack.c.l.b16 %v48
    %v85 = vunpack.c.h.b16 %v48
    %v86 = vunpack.c.l.b16 %v49
    %v87 = vunpack.c.h.b16 %v49
    %v88 = vunpack.c.l.b16 %v50
    %v89 = vunpack.c.h.b16 %v50
    %v90 = vpack.c.b16 %v80, %v70
    %v91 = vpack.c.b16 %v81, %v71
    %v92 = vpack.c.b16 %v82, %v72
    %v93 = vpack.c.b16 %v83, %v73
    %v94 = vpack.c.b16 %v84, %v74
    %v95 = vpack.c.b16 %v85, %v75
    %v96 = vpack.c.b16 %v86, %v76
    %v97 = vpack.c.b16 %v87, %v77
    %v98 = vpack.c.b16 %v88, %v78
    %v99 = vpack.c.b16 %v89, %v79
    %v112 = vcombine.high %v51, %v51
    %v114 = vunpack.c.l.s4 1966171168
    %v115 = vunpack.c.0.s8 %v114
    %v116 = vlaneseq
    %v117 = vshrl.u32 %v116, 7
    %v118 = vsub.s32 %v115, %v117
    %v119 = vrot.slane %v51, %v118
    %v121 = vunpack.c.l.s4 1966171168
    %v122 = vunpack.c.0.s8 %v121
    %v123 = vlaneseq
    %v124 = vshrl.u32 %v123, 7
    %v125 = vsub.s32 %v122, %v124
    %v126 = vrot.slane %v112, %v125
    %v127 = vcombine.high %v119, %v119
    %v128 = vcombine.high %v126, %v126
    %v130 = vunpack.c.l.s4 1966171168
    %v131 = vunpack.c.0.s8 %v130
    %v132 = vlaneseq
    %v133 = vshrl.u32 %v132, 7
    %v134 = vsub.s32 %v131, %v133
    %v135 = vrot.slane %v119, %v134
    %v137 = vunpack.c.l.s4 1966171168
    %v138 = vunpack.c.0.s8 %v137
    %v139 = vlaneseq
    %v140 = vshrl.u32 %v139, 7
    %v141 = vsub.s32 %v138, %v140
    %v142 = vrot.slane %v126, %v141
    %v144 = vunpack.c.l.s4 1966171168
    %v145 = vunpack.c.0.s8 %v144
    %v146 = vlaneseq
    %v147 = vshrl.u32 %v146, 7
    %v148 = vsub.s32 %v145, %v147
    %v149 = vrot.slane %v127, %v148
    %v151 = vunpack.c.l.s4 1966171168
    %v152 = vunpack.c.0.s8 %v151
    %v153 = vlaneseq
    %v154 = vshrl.u32 %v153, 7
    %v155 = vsub.s32 %v152, %v154
    %v156 = vrot.slane %v128, %v155
    %v157 = vcombine.high %v135, %v135
    %v158 = vcombine.high %v142, %v142
    %v159 = vcombine.high %v149, %v149
    %v160 = vcombine.high %v156, %v156
    %v162 = vunpack.c.l.s4 1966171168
    %v163 = vunpack.c.0.s8 %v162
    %v164 = vlaneseq
    %v165 = vshrl.u32 %v164, 7
    %v166 = vsub.s32 %v163, %v165
    %v167 = vrot.slane %v52, %v166
    %v168 = vcombine.high %v167, %v167
    %v170 = vunpack.c.l.s4 1966171168
    %v171 = vunpack.c.0.s8 %v170
    %v172 = vlaneseq
    %v173 = vshrl.u32 %v172, 7
    %v174 = vsub.s32 %v171, %v173
    %v175 = vrot.slane %v167, %v174
    %v177 = vunpack.c.l.s4 1966171168
    %v178 = vunpack.c.0.s8 %v177
    %v179 = vlaneseq
    %v180 = vshrl.u32 %v179, 7
    %v181 = vsub.s32 %v178, %v180
    %v182 = vrot.slane %v168, %v181
    %193 = vmatprep.subr.bf16.mxu0 0
    %194 = vmatpush1.bf16.xpose.msra.mxu0 0
    %195 = vmatprep.subr.bf16.mxu0 0
    %196 = vmatpush1.bf16.xpose.msra.mxu0 0
    %197 = vmatprep.subr.bf16.mxu0 0
    %198 = vmatpush1.bf16.xpose.msra.mxu0 0
    %199 = vmatprep.subr.bf16.mxu0 0
    %200 = vmatpush1.bf16.xpose.msra.mxu0 0
    %201 = vmatprep.subr.bf16.mxu0 0
    %202 = vmatpush1.bf16.xpose.msra.mxu0 0
    %203 = vmatprep.subr.bf16.mxu0 0
    %204 = vmatpush1.bf16.xpose.msra.mxu0 0
    %205 = vmatprep.subr.bf16.mxu0 0
    %206 = vmatpush1.bf16.xpose.msra.mxu0 0
    %207 = vmatprep.subr.bf16.mxu0 %v149
    %208 = vmatpush1.bf16.xpose.msra.mxu0 %v135
    %209 = vmatprep.subr.bf16.mxu0 0
    %210 = vmatpush2.bf16.xpose.msra.mxu0 0
    %211 = vmatprep.subr.bf16.mxu0 0
    %212 = vmatpush2.bf16.xpose.msra.mxu0 0
    %213 = vmatprep.subr.bf16.mxu0 0
    %214 = vmatpush2.bf16.xpose.msra.mxu0 0
    %215 = vmatprep.subr.bf16.mxu0 0
    %216 = vmatpush2.bf16.xpose.msra.mxu0 0
    %217 = vmatprep.subr.bf16.mxu0 0
    %218 = vmatpush2.bf16.xpose.msra.mxu0 0
    %219 = vmatprep.subr.bf16.mxu0 0
    %220 = vmatpush2.bf16.xpose.msra.mxu0 0
    %221 = vmatprep.subr.bf16.mxu0 0
    %222 = vmatpush2.bf16.xpose.msra.mxu0 0
    %223 = vmatprep.subr.bf16.mxu0 0
    %224 = vmatpush2.bf16.xpose.msra.mxu0 0
    %225 = vmatprep.mubr.bf16.mxu0 %v91
    %226 = vmatmul.mubr.bf16.gmra.mxu0 %v90
    %v227 = vpop.f32.mrf.mxu0
    %v228 = vadd.f32 %v58, %v227
    %v229 = vpop.f32.mrf.mxu0
    %v230 = vpop.f32.mrf.mxu0
    %v231 = vadd.f32 %v58, %v230
    %v232 = vpop.f32.mrf.mxu0
    %233 = vdwg.mxu0
    %234 = vmatprep.subr.bf16.mxu0 0
    %235 = vmatpush1.bf16.xpose.msra.mxu0 0
    %236 = vmatprep.subr.bf16.mxu0 0
    %237 = vmatpush1.bf16.xpose.msra.mxu0 0
    %238 = vmatprep.subr.bf16.mxu0 0
    %239 = vmatpush1.bf16.xpose.msra.mxu0 0
    %240 = vmatprep.subr.bf16.mxu0 0
    %241 = vmatpush1.bf16.xpose.msra.mxu0 0
    %242 = vmatprep.subr.bf16.mxu0 0
    %243 = vmatpush1.bf16.xpose.msra.mxu0 0
    %244 = vmatprep.subr.bf16.mxu0 0
    %245 = vmatpush1.bf16.xpose.msra.mxu0 0
    %246 = vmatprep.subr.bf16.mxu0 0
    %247 = vmatpush1.bf16.xpose.msra.mxu0 0
    %248 = vmatprep.subr.bf16.mxu0 %v159
    %249 = vmatpush1.bf16.xpose.msra.mxu0 %v157
    %250 = vmatprep.subr.bf16.mxu0 0
    %251 = vmatpush2.bf16.xpose.msra.mxu0 0
    %252 = vmatprep.subr.bf16.mxu0 0
    %253 = vmatpush2.bf16.xpose.msra.mxu0 0
    %254 = vmatprep.subr.bf16.mxu0 0
    %255 = vmatpush2.bf16.xpose.msra.mxu0 0
    %256 = vmatprep.subr.bf16.mxu0 0
    %257 = vmatpush2.bf16.xpose.msra.mxu0 0
    %258 = vmatprep.subr.bf16.mxu0 0
    %259 = vmatpush2.bf16.xpose.msra.mxu0 0
    %260 = vmatprep.subr.bf16.mxu0 0
    %261 = vmatpush2.bf16.xpose.msra.mxu0 0
    %262 = vmatprep.subr.bf16.mxu0 0
    %263 = vmatpush2.bf16.xpose.msra.mxu0 0
    %264 = vmatprep.subr.bf16.mxu0 0
    %265 = vmatpush2.bf16.xpose.msra.mxu0 0
    %266 = vmatprep.mubr.bf16.mxu0 %v93
    %267 = vmatmul.mubr.bf16.gmra.mxu0 %v92
    %v268 = vpop.f32.mrf.mxu0
    %v269 = vadd.f32 %v228, %v268
    %v270 = vpop.f32.mrf.mxu0
    %v271 = vpop.f32.mrf.mxu0
    %v272 = vadd.f32 %v231, %v271
    %v273 = vpop.f32.mrf.mxu0
    %274 = vdwg.mxu0
    %275 = vmatprep.subr.bf16.mxu0 0
    %276 = vmatpush1.bf16.xpose.msra.mxu0 0
    %277 = vmatprep.subr.bf16.mxu0 0
    %278 = vmatpush1.bf16.xpose.msra.mxu0 0
    %279 = vmatprep.subr.bf16.mxu0 0
    %280 = vmatpush1.bf16.xpose.msra.mxu0 0
    %281 = vmatprep.subr.bf16.mxu0 0
    %282 = vmatpush1.bf16.xpose.msra.mxu0 0
    %283 = vmatprep.subr.bf16.mxu0 0
    %284 = vmatpush1.bf16.xpose.msra.mxu0 0
    %285 = vmatprep.subr.bf16.mxu0 0
    %286 = vmatpush1.bf16.xpose.msra.mxu0 0
    %287 = vmatprep.subr.bf16.mxu0 0
    %288 = vmatpush1.bf16.xpose.msra.mxu0 0
    %289 = vmatprep.subr.bf16.mxu0 %v156
    %290 = vmatpush1.bf16.xpose.msra.mxu0 %v142
    %291 = vmatprep.subr.bf16.mxu0 0
    %292 = vmatpush2.bf16.xpose.msra.mxu0 0
    %293 = vmatprep.subr.bf16.mxu0 0
    %294 = vmatpush2.bf16.xpose.msra.mxu0 0
    %295 = vmatprep.subr.bf16.mxu0 0
    %296 = vmatpush2.bf16.xpose.msra.mxu0 0
    %297 = vmatprep.subr.bf16.mxu0 0
    %298 = vmatpush2.bf16.xpose.msra.mxu0 0
    %299 = vmatprep.subr.bf16.mxu0 0
    %300 = vmatpush2.bf16.xpose.msra.mxu0 0
    %301 = vmatprep.subr.bf16.mxu0 0
    %302 = vmatpush2.bf16.xpose.msra.mxu0 0
    %303 = vmatprep.subr.bf16.mxu0 0
    %304 = vmatpush2.bf16.xpose.msra.mxu0 0
    %305 = vmatprep.subr.bf16.mxu0 0
    %306 = vmatpush2.bf16.xpose.msra.mxu0 0
    %307 = vmatprep.mubr.bf16.mxu0 %v95
    %308 = vmatmul.mubr.bf16.gmra.mxu0 %v94
    %v309 = vpop.f32.mrf.mxu0
    %v310 = vadd.f32 %v269, %v309
    %v311 = vpop.f32.mrf.mxu0
    %v312 = vpop.f32.mrf.mxu0
    %v313 = vadd.f32 %v272, %v312
    %v314 = vpop.f32.mrf.mxu0
    %315 = vdwg.mxu0
    %316 = vmatprep.subr.bf16.mxu0 0
    %317 = vmatpush1.bf16.xpose.msra.mxu0 0
    %318 = vmatprep.subr.bf16.mxu0 0
    %319 = vmatpush1.bf16.xpose.msra.mxu0 0
    %320 = vmatprep.subr.bf16.mxu0 0
    %321 = vmatpush1.bf16.xpose.msra.mxu0 0
    %322 = vmatprep.subr.bf16.mxu0 0
    %323 = vmatpush1.bf16.xpose.msra.mxu0 0
    %324 = vmatprep.subr.bf16.mxu0 0
    %325 = vmatpush1.bf16.xpose.msra.mxu0 0
    %326 = vmatprep.subr.bf16.mxu0 0
    %327 = vmatpush1.bf16.xpose.msra.mxu0 0
    %328 = vmatprep.subr.bf16.mxu0 0
    %329 = vmatpush1.bf16.xpose.msra.mxu0 0
    %330 = vmatprep.subr.bf16.mxu0 %v160
    %331 = vmatpush1.bf16.xpose.msra.mxu0 %v158
    %332 = vmatprep.subr.bf16.mxu0 0
    %333 = vmatpush2.bf16.xpose.msra.mxu0 0
    %334 = vmatprep.subr.bf16.mxu0 0
    %335 = vmatpush2.bf16.xpose.msra.mxu0 0
    %336 = vmatprep.subr.bf16.mxu0 0
    %337 = vmatpush2.bf16.xpose.msra.mxu0 0
    %338 = vmatprep.subr.bf16.mxu0 0
    %339 = vmatpush2.bf16.xpose.msra.mxu0 0
    %340 = vmatprep.subr.bf16.mxu0 0
    %341 = vmatpush2.bf16.xpose.msra.mxu0 0
    %342 = vmatprep.subr.bf16.mxu0 0
    %343 = vmatpush2.bf16.xpose.msra.mxu0 0
    %344 = vmatprep.subr.bf16.mxu0 0
    %345 = vmatpush2.bf16.xpose.msra.mxu0 0
    %346 = vmatprep.subr.bf16.mxu0 0
    %347 = vmatpush2.bf16.xpose.msra.mxu0 0
    %348 = vmatprep.mubr.bf16.mxu0 %v97
    %349 = vmatmul.mubr.bf16.gmra.mxu0 %v96
    %v350 = vpop.f32.mrf.mxu0
    %v351 = vadd.f32 %v310, %v350
    %v352 = vpop.f32.mrf.mxu0
    %v353 = vpop.f32.mrf.mxu0
    %v354 = vadd.f32 %v313, %v353
    %v355 = vpop.f32.mrf.mxu0
    %356 = vdwg.mxu0
    %357 = vmatprep.subr.bf16.mxu0 0
    %358 = vmatpush1.bf16.xpose.msra.mxu0 0
    %359 = vmatprep.subr.bf16.mxu0 0
    %360 = vmatpush1.bf16.xpose.msra.mxu0 0
    %361 = vmatprep.subr.bf16.mxu0 0
    %362 = vmatpush1.bf16.xpose.msra.mxu0 0
    %363 = vmatprep.subr.bf16.mxu0 0
    %364 = vmatpush1.bf16.xpose.msra.mxu0 0
    %365 = vmatprep.subr.bf16.mxu0 0
    %366 = vmatpush1.bf16.xpose.msra.mxu0 0
    %367 = vmatprep.subr.bf16.mxu0 0
    %368 = vmatpush1.bf16.xpose.msra.mxu0 0
    %369 = vmatprep.subr.bf16.mxu0 0
    %370 = vmatpush1.bf16.xpose.msra.mxu0 0
    %371 = vmatprep.subr.bf16.mxu0 %v182
    %372 = vmatpush1.bf16.xpose.msra.mxu0 %v175
    %373 = vmatprep.subr.bf16.mxu0 0
    %374 = vmatpush2.bf16.xpose.msra.mxu0 0
    %375 = vmatprep.subr.bf16.mxu0 0
    %376 = vmatpush2.bf16.xpose.msra.mxu0 0
    %377 = vmatprep.subr.bf16.mxu0 0
    %378 = vmatpush2.bf16.xpose.msra.mxu0 0
    %379 = vmatprep.subr.bf16.mxu0 0
    %380 = vmatpush2.bf16.xpose.msra.mxu0 0
    %381 = vmatprep.subr.bf16.mxu0 0
    %382 = vmatpush2.bf16.xpose.msra.mxu0 0
    %383 = vmatprep.subr.bf16.mxu0 0
    %384 = vmatpush2.bf16.xpose.msra.mxu0 0
    %385 = vmatprep.subr.bf16.mxu0 0
    %386 = vmatpush2.bf16.xpose.msra.mxu0 0
    %387 = vmatprep.subr.bf16.mxu0 0
    %388 = vmatpush2.bf16.xpose.msra.mxu0 0
    %389 = vmatprep.mubr.bf16.mxu0 %v99
    %390 = vmatmul.mubr.bf16.gmra.mxu0 %v98
    %v391 = vpop.f32.mrf.mxu0
    %v392 = vadd.f32 %v351, %v391
    %v393 = vpop.f32.mrf.mxu0
    %v394 = vpop.f32.mrf.mxu0
    %v395 = vadd.f32 %v354, %v394
    %v396 = vpop.f32.mrf.mxu0
    %397 = vdwg.mxu0
    %vm398 = vcmask 15360
    %399 = vst.msk [vmem:[%s3] sm:$0xff] %vm398, %v392
    %400 = vst.msk [vmem:[%s3 + $0x8] sm:$0xff] %vm398, %v395
    // Predicated region
    $region22: #{tpu_custom_call.1} parent=1 // pred_check
      _
    $region23: #{tpu_custom_call.1} parent=1 // pred_check_branch
      %402 = sbr.rel (0) target = $region25
    $region24: #{tpu_custom_call.1} parent=1 // pred_region
      _
    $region25: #{tpu_custom_call.1} parent=1 // pred_fallthru
      _
    // Predicated region
    $region26: #{tpu_custom_call.1} parent=1 // pred_check
      _
    $region27: #{tpu_custom_call.1} parent=1 // pred_check_branch
      %404 = sbr.rel (0) target = $region29
    $region28: #{tpu_custom_call.1} parent=1 // pred_region
      _
    $region29: #{tpu_custom_call.1} parent=1 // pred_fallthru
      _
    %405 = vsyncpa [#allocation3], 1
    %406 = vsyncpa [#allocation5], 1

</llo_original>
